<compile_context>
chip_gen: v7x
topology: tpu7x:2x2x1
jax: 0.10.0
libtpu: 0.0.40
codegen_flags: <defaults>
</compile_context>

<pallas_src>
import functools

import jax
import jax.numpy as jnp
from jax.experimental import pallas as pl
from jax.experimental.pallas import tpu as pltpu

_LANE = 128
_SUBLANE = 8
_LIVE_VMEM_TARGET = 24 * 1024 * 1024   # double-buffered input bytes per grid step
_VMEM_LIMIT_BYTES = 48 * 1024 * 1024   # < v7x 64 MiB/TC physical VMEM


def _round_up(x, m):
    return ((x + m - 1) // m) * m


def _reward_criterion_kernel(inp_ref, seq_ref, reward_ref, part_ref, *,
                             tile_b, total_b, needs_row_mask):
    inp = inp_ref[...]        # (tile_b, T)       f32  log-probs of sampled tokens
    seq = seq_ref[...]        # (tile_b, T)       int  sampled token ids
    reward = reward_ref[...]  # (tile_b, T or 1)  f32  per-token / per-seq reward

    # mask = (seq > 0) shifted right by one step along time, first column := 1.
    mask = (seq > 0).astype(jnp.float32)
    rolled = pltpu.roll(mask, shift=1, axis=1)                 # col t <- mask[:, t-1]
    col = jax.lax.broadcasted_iota(jnp.int32, mask.shape, 1)
    mask = jnp.where(col == 0, jnp.float32(1.0), rolled)

    # Rows past the true batch size (partial last tile) hold undefined data:
    # zero their mask.  Compiled in only when B % tile_b != 0.
    if needs_row_mask:
        row = (jax.lax.broadcasted_iota(jnp.int32, mask.shape, 0)
               + pl.program_id(0) * tile_b)
        mask = jnp.where(row < total_b, mask, jnp.float32(0.0))

    # mask is exactly 0/1: the select equals multiplying by mask for finite
    # inputs and is NaN-safe for undefined padded data.  reward broadcasts
    # across T when it is a per-sequence (tile_b, 1) block.
    prod = jnp.where(mask > 0.0, inp * reward, jnp.float32(0.0))

    part_ref[0, 0] = -jnp.sum(prod)   # numerator partial: sum(-inp * reward * mask)
    part_ref[0, 1] = jnp.sum(mask)    # denominator partial: sum(mask)


def reward_criterion(inp, seq, reward, *, tile_b=None):
    """SCST loss. inp: (B,T) f32, seq: (B,T) int, reward: (B,T) | (B,1) | (B,) f32."""
    B, T = inp.shape
    inp = inp.astype(jnp.float32)
    reward = jnp.asarray(reward, jnp.float32)
    if reward.ndim == 1:
        reward = reward.reshape(B, 1)
    Tr = reward.shape[1]
    if Tr not in (1, T):
        raise ValueError(f"reward must have trailing dim 1 or {T}, got {Tr}")

    if tile_b is None:
        # Padded (8,128) accounting: each stream's (8-row, padded-T) group,
        # x2 pipeline buffers, x4 bytes.  seq assumed 32-bit here; narrower
        # seq dtypes only shrink this further.
        padded_t = _round_up(T, _LANE)
        padded_tr = _round_up(Tr, _LANE)
        bytes_per_group = 2 * 4 * _SUBLANE * (2 * padded_t + padded_tr)
        groups = max(1, _LIVE_VMEM_TARGET // bytes_per_group)
        tile_b = groups * _SUBLANE
        if B > _SUBLANE:
            # Keep >= 2 grid steps so both v7x TensorCores get work.
            tile_b = min(tile_b, _round_up(-(-B // 2), _SUBLANE))
        if tile_b >= B:
            tile_b = B          # single full-batch tile (block dim == array dim)
    tile_b = max(1, min(tile_b, B))
    num_tiles = -(-B // tile_b)
    needs_row_mask = (B % tile_b) != 0

    kernel = functools.partial(
        _reward_criterion_kernel,
        tile_b=tile_b, total_b=B, needs_row_mask=needs_row_mask)

    hbm_bytes = (4 * B * T                      # input  (f32)
                 + seq.dtype.itemsize * B * T   # seq
                 + 4 * B * Tr                   # reward (f32, maybe per-seq)
                 + num_tiles * 2 * 4)           # partials out

    partials = pl.pallas_call(
        kernel,
        out_shape=jax.ShapeDtypeStruct((num_tiles, 2), jnp.float32),
        grid=(num_tiles,),
        in_specs=[
            pl.BlockSpec((tile_b, T), lambda i: (i, 0)),
            pl.BlockSpec((tile_b, T), lambda i: (i, 0)),
            pl.BlockSpec((tile_b, Tr), lambda i: (i, 0)),
        ],
        out_specs=pl.BlockSpec((1, 2), lambda i: (i, 0), memory_space=pltpu.SMEM),
        compiler_params=pltpu.CompilerParams(
            dimension_semantics=("parallel",),
            vmem_limit_bytes=_VMEM_LIMIT_BYTES,
        ),
        cost_estimate=pl.CostEstimate(
            flops=5 * B * T, transcendentals=0, bytes_accessed=hbm_bytes),
    )(inp, seq, reward)

    num = jnp.sum(partials[:, 0])
    den = jnp.sum(partials[:, 1])
    return (num / den).astype(jnp.float32)


def _reference(inp, seq, reward):
    B, T = inp.shape
    reward = jnp.broadcast_to(jnp.asarray(reward, jnp.float32).reshape(B, -1), (B, T))
    mask = (seq > 0).astype(jnp.float32)
    mask = jnp.concatenate([jnp.ones((B, 1), jnp.float32), mask[:, :-1]], axis=1)
    return jnp.sum(-inp * reward * mask) / jnp.sum(mask)


if __name__ == "__main__":
    def _check(out, ref, name):
        assert jnp.allclose(out, ref, rtol=1e-4, atol=1e-5), (name, out, ref)

    # Case 1: small single-tile shapes, full (B, T) reward.
    k1, k2, k3 = jax.random.split(jax.random.PRNGKey(0), 3)
    B, T = 4, 16
    inp = -jax.random.uniform(k1, (B, T), jnp.float32, minval=0.1, maxval=5.0)
    seq = jax.random.randint(k2, (B, T), minval=0, maxval=10, dtype=jnp.int32)
    reward = jax.random.normal(k3, (B, T), jnp.float32)
    out = reward_criterion(inp, seq, reward)
    jax.block_until_ready(out)
    _check(out, _reference(inp, seq, reward), "case1")

    # Case 2: multi-tile grid with a partial last tile (explicit tile_b).
    k4, k5, k6 = jax.random.split(jax.random.PRNGKey(1), 3)
    B2, T2 = 20, 48
    inp2 = -jax.random.uniform(k4, (B2, T2), jnp.float32, minval=0.1, maxval=5.0)
    seq2 = jax.random.randint(k5, (B2, T2), minval=0, maxval=6, dtype=jnp.int32)
    reward2 = jax.random.normal(k6, (B2, T2), jnp.float32)
    out2 = reward_criterion(inp2, seq2, reward2, tile_b=8)
    jax.block_until_ready(out2)
    _check(out2, _reference(inp2, seq2, reward2), "case2")

    # Case 3: per-sequence (B,) reward fast path, auto tiler (2 tiles, partial last).
    k7, k8, k9 = jax.random.split(jax.random.PRNGKey(2), 3)
    B3, T3 = 24, 32
    inp3 = -jax.random.uniform(k7, (B3, T3), jnp.float32, minval=0.1, maxval=5.0)
    seq3 = jax.random.randint(k8, (B3, T3), minval=0, maxval=6, dtype=jnp.int32)
    reward3 = jax.random.normal(k9, (B3,), jnp.float32)
    out3 = reward_criterion(inp3, seq3, reward3)
    jax.block_until_ready(out3)
    _check(out3, _reference(inp3, seq3, reward3), "case3")

    # Case 4: T = 256 (multi-lane-tile time axis), auto tiler (even 2-tile split).
    ka, kb, kc = jax.random.split(jax.random.PRNGKey(3), 3)
    B4, T4 = 16, 256
    inp4 = -jax.random.uniform(ka, (B4, T4), jnp.float32, minval=0.1, maxval=5.0)
    seq4 = jax.random.randint(kb, (B4, T4), minval=0, maxval=4, dtype=jnp.int32)
    reward4 = jax.random.normal(kc, (B4, T4), jnp.float32)
    out4 = reward_criterion(inp4, seq4, reward4)
    jax.block_until_ready(out4)
    _check(out4, _reference(inp4, seq4, reward4), "case4")

    print("KERNEL_OK")
</pallas_src>

<mosaic_0001>
module attributes {stable_mosaic.version = 11 : i64} {
  func.func @_reward_criterion_kernel(%arg0: i32, %arg1: memref<4x16xf32, #tpu.memory_space<vmem>>, %arg2: memref<4x16xi32, #tpu.memory_space<vmem>>, %arg3: memref<4x16xf32, #tpu.memory_space<vmem>>, %arg4: memref<1x2xf32, #tpu.memory_space<smem>>) attributes {dimension_semantics = [#tpu.dimension_semantics<parallel>], iteration_bounds = array<i64: 1>, scalar_prefetch = 0 : i64, scratch_operands = 0 : i64, tpu.core_type = #tpu.core_type<tc>, window_params = [{transform_indices = @transform_0, window_bounds = array<i64: 4, 16>}, {transform_indices = @transform_1, window_bounds = array<i64: 4, 16>}, {transform_indices = @transform_2, window_bounds = array<i64: 4, 16>}, {transform_indices = @transform_3, window_bounds = array<i64: 1, 2>}]} {
    %c0 = arith.constant 0 : index
    %c0_0 = arith.constant 0 : index
    %0 = vector.load %arg1[%c0, %c0_0] : memref<4x16xf32, #tpu.memory_space<vmem>>, vector<4x16xf32>
    %c0_1 = arith.constant 0 : index
    %c0_2 = arith.constant 0 : index
    %1 = vector.load %arg2[%c0_1, %c0_2] : memref<4x16xi32, #tpu.memory_space<vmem>>, vector<4x16xi32>
    %c0_3 = arith.constant 0 : index
    %c0_4 = arith.constant 0 : index
    %2 = vector.load %arg3[%c0_3, %c0_4] : memref<4x16xf32, #tpu.memory_space<vmem>>, vector<4x16xf32>
    %c0_i32 = arith.constant 0 : i32
    %3 = vector.broadcast %c0_i32 : i32 to vector<4x16xi32>
    %4 = arith.cmpi sgt, %1, %3 : vector<4x16xi32>
    %5 = arith.extui %4 : vector<4x16xi1> to vector<4x16xi32>
    %6 = arith.sitofp %5 : vector<4x16xi32> to vector<4x16xf32>
    %c1_i32 = arith.constant 1 : i32
    %7 = tpu.dynamic_rotate %6 by %c1_i32 dim 1 : vector<4x16xf32>, i32 -> vector<4x16xf32>
    %8 = tpu.iota {dimensions = array<i32: 1>} : vector<4x16xi32>
    %c0_i32_5 = arith.constant 0 : i32
    %9 = vector.broadcast %c0_i32_5 : i32 to vector<4x16xi32>
    %10 = arith.cmpi eq, %8, %9 : vector<4x16xi32>
    %cst = arith.constant 1.000000e+00 : f32
    %11 = vector.broadcast %cst : f32 to vector<4x16xf32>
    %12 = arith.select %10, %11, %7 : vector<4x16xi1>, vector<4x16xf32>
    %cst_6 = arith.constant 0.000000e+00 : f32
    %13 = vector.broadcast %cst_6 : f32 to vector<4x16xf32>
    %14 = arith.cmpf ogt, %12, %13 : vector<4x16xf32>
    %15 = arith.mulf %0, %2 : vector<4x16xf32>
    %cst_7 = arith.constant 0.000000e+00 : f32
    %16 = vector.broadcast %cst_7 : f32 to vector<4x16xf32>
    %17 = arith.select %14, %15, %16 : vector<4x16xi1>, vector<4x16xf32>
    %18 = vector.shape_cast %17 : vector<4x16xf32> to vector<1x4x16xf32>
    %cst_8 = arith.constant dense<0.000000e+00> : vector<1xf32>
    %19 = vector.multi_reduction <add>, %18, %cst_8 [1, 2] : vector<1x4x16xf32> to vector<1xf32>
    %20 = vector.shape_cast %19 : vector<1xf32> to vector<1x1x1xf32>
    %21 = vector.extract %20[0, 0, 0] : f32 from vector<1x1x1xf32>
    %cst_9 = arith.constant 0.000000e+00 : f32
    %22 = arith.subf %cst_9, %21 : f32
    %c0_10 = arith.constant 0 : index
    %c0_11 = arith.constant 0 : index
    %23 = memref.load %arg4[%c0_10, %c0_11] : memref<1x2xf32, #tpu.memory_space<smem>>
    memref.store %22, %arg4[%c0_10, %c0_11] : memref<1x2xf32, #tpu.memory_space<smem>>
    %24 = vector.shape_cast %12 : vector<4x16xf32> to vector<1x4x16xf32>
    %cst_12 = arith.constant dense<0.000000e+00> : vector<1xf32>
    %25 = vector.multi_reduction <add>, %24, %cst_12 [1, 2] : vector<1x4x16xf32> to vector<1xf32>
    %26 = vector.shape_cast %25 : vector<1xf32> to vector<1x1x1xf32>
    %27 = vector.extract %26[0, 0, 0] : f32 from vector<1x1x1xf32>
    %c0_13 = arith.constant 0 : index
    %c1 = arith.constant 1 : index
    %28 = memref.load %arg4[%c0_13, %c1] : memref<1x2xf32, #tpu.memory_space<smem>>
    memref.store %27, %arg4[%c0_13, %c1] : memref<1x2xf32, #tpu.memory_space<smem>>
    return
  }
  func.func @transform_0(%arg0: i32) -> (i32, i32) {
    %c0_i32 = arith.constant 0 : i32
    %c0_i32_0 = arith.constant 0 : i32
    return %arg0, %c0_i32 : i32, i32
  }
  func.func @transform_1(%arg0: i32) -> (i32, i32) {
    %c0_i32 = arith.constant 0 : i32
    %c0_i32_0 = arith.constant 0 : i32
    return %arg0, %c0_i32 : i32, i32
  }
  func.func @transform_2(%arg0: i32) -> (i32, i32) {
    %c0_i32 = arith.constant 0 : i32
    %c0_i32_0 = arith.constant 0 : i32
    return %arg0, %c0_i32 : i32, i32
  }
  func.func @transform_3(%arg0: i32) -> (i32, i32) {
    %c0_i32 = arith.constant 0 : i32
    %c0_i32_0 = arith.constant 0 : i32
    return %arg0, %c0_i32 : i32, i32
  }
}

</mosaic_0001>

<llo_original>
// kernel: tpu_custom_call.1
$region0: #{tpu_custom_call.1}
  #allocation0 [shape = 'u32[]', space=smem, size = 0x4, offset = 0x4, fixed_abs, tag = 'smem constant byte address 0x4 - core index']
  #allocation1 [shape = 'u32[144,128]{1,0:T(1,128)}', space=vmem, size = 0x12000, scoped, tag = 'internal scratch']
  %s0 = inlined_call_operand.hbm [shape: f32[4,16], index: 0, kind: input, shape index: {}]
  %s1 = inlined_call_operand.hbm [shape: s32[4,16], index: 1, kind: input, shape index: {}]
  %s2 = inlined_call_operand.vmem [shape: f32[4,16], index: 2, kind: input, shape index: {}]
  %s3 = inlined_call_operand.hbm [shape: f32[1,2], index: 3, kind: output, shape index: {}]
  %s4 = sld [smem:[#allocation0]]
  $region30: #{tpu_custom_call.1} parent=0
    _
  %s6 = ssub.s32 1, %s4
  %s7 = scalar_select 0, %s6, %s4
  $region1: #{tpu_custom_call.1} parent=0
    #allocation2 [shape = 'u8[2048]{0}', space=vmem, size = 0x800, scoped, tag = 'input window, operand 0, single buffered']
    #allocation3 [shape = 's32[1]{0}', space=sflag, size = 0x4, scoped, tag = 'scoped memory for tpu_custom_call.1']
    #allocation4 [shape = 's32[1]{0}', space=sflag, size = 0x4, scoped, tag = 'scoped memory for tpu_custom_call.1']
    #allocation5 [shape = 'u8[2048]{0}', space=vmem, size = 0x800, scoped, tag = 'input window, operand 1, single buffered']
    #allocation6 [shape = 's32[1]{0}', space=sflag, size = 0x4, scoped, tag = 'scoped memory for tpu_custom_call.1']
    #allocation7 [shape = 'u8[512]{0}', space=smem, size = 0x200, scoped, tag = 'output window, operand 0, single buffered']
    %8 = vsyncpa [#allocation3], 0
    %9 = vsyncpa [#allocation6], 0
    %10 = vsyncpa [#allocation4], 0
    // Predicated region
    $region2: #{tpu_custom_call.1} parent=1 // pred_check
      _
    $region3: #{tpu_custom_call.1} parent=1 // pred_check_branch
      %12 = sbr.rel (0) target = $region5
    $region4: #{tpu_custom_call.1} parent=1 // pred_region
      %s14 = ssub.s32 64, 64
      %15 = vsyncadd [#allocation3], %s14
      %s17 = sshll.u32 [#allocation2], 4
      %s18 = int_to_ptr.vmem [resolvable:$true] %s17
      %20 = dma.hbm_to_vmem [thread:$0]  %s0, 64, %s18, [#allocation3]
    $region5: #{tpu_custom_call.1} parent=1 // pred_fallthru
      _
    // Predicated region
    $region6: #{tpu_custom_call.1} parent=1 // pred_check
      _
    $region7: #{tpu_custom_call.1} parent=1 // pred_check_branch
      %22 = sbr.rel (0) target = $region9
    $region8: #{tpu_custom_call.1} parent=1 // pred_region
      %s24 = ssub.s32 64, 64
      %25 = vsyncadd [#allocation6], %s24
      %s27 = sshll.u32 [#allocation5], 4
      %s28 = int_to_ptr.vmem [resolvable:$true] %s27
      %30 = dma.hbm_to_vmem [thread:$0]  %s1, 64, %s28, [#allocation6]
    $region9: #{tpu_custom_call.1} parent=1 // pred_fallthru
      _
    // Predicated region
    $region10: #{tpu_custom_call.1} parent=1 // pred_check
      _
    $region11: #{tpu_custom_call.1} parent=1 // pred_check_branch
      %32 = sbr.rel (0) target = $region13
    $region12: #{tpu_custom_call.1} parent=1 // pred_region
      _
    $region13: #{tpu_custom_call.1} parent=1 // pred_fallthru
      _
    // Predicated region
    $region14: #{tpu_custom_call.1} parent=1 // pred_check
      _
    $region15: #{tpu_custom_call.1} parent=1 // pred_check_branch
      %34 = sbr.rel (0) target = $region17
    $region16: #{tpu_custom_call.1} parent=1 // pred_region
      %35 = dma.done [#allocation3], 64
    $region17: #{tpu_custom_call.1} parent=1 // pred_fallthru
      _
    // Predicated region
    $region18: #{tpu_custom_call.1} parent=1 // pred_check
      _
    $region19: #{tpu_custom_call.1} parent=1 // pred_check_branch
      %37 = sbr.rel (0) target = $region21
    $region20: #{tpu_custom_call.1} parent=1 // pred_region
      %38 = dma.done [#allocation6], 64
    $region21: #{tpu_custom_call.1} parent=1 // pred_fallthru
      _
    %v39 = vld [vmem:[#allocation2] sm:$0xf]
    %v40 = vld [vmem:[#allocation5] sm:$0xf]
    %v41 = vld [vmem:[%s2] sm:$0xf]
    %vm42 = vcmp.gt.s32.totalorder %v40, 0
    %v43 = vsel %vm42, 1, 0
    %v44 = vcvt.s32.f32 %v43
    %vm45 = vcmask 1047680
    %46 = vrot.lane.b32.xlu0 %v44, 16
    %v47 = vpop.permute.xlu0 %46
    %v48 = vsel %vm45, %v47, %v44
    %49 = vrot.lane.b32.xlu0 %v48, 16
    %v50 = vpop.permute.xlu0 %49
    %v51 = vsel %vm45, %v50, %v44
    %v52 = vlaneseq
    %v53 = vand.u32 %v52, 127
    %vm54 = vcmp.eq.s32.totalorder %v53, 0
    %56 = vrot.lane.b32.xlu0 %v51, 113
    %v57 = vpop.permute.xlu0 %56
    %v59 = vsel %vm54, 1.0, %v57
    %vm60 = vcmp.gt.f32.partialorder %v59, 0.0
    %v61 = vmul.f32 %v39, %v41
    %v62 = vsel %vm60, %v61, 0.0
    %vm63 = vcmask 125952
    %v64 = vsel %vm63, %v62, 0.0
    %65 = vadd.xlane.f32.xlu0 %v64
    %v66 = vpop.xlane.xlu0 %65
    %v67 = vrot.slane %v66, 4
    %v68 = vadd.f32 %v66, %v67
    %v69 = vrot.slane %v68, 2
    %v70 = vadd.f32 %v68, %v69
    %v71 = vrot.slane %v70, 1
    %v72 = vadd.f32 %v70, %v71
    %s73 = vtos %v72
    %s74 = ssub.f32 0.0, %s73
    %s75 = scalar_lea.smem [#allocation7], 0
    %76 = sst [smem:[%s75]] %s74
    %v77 = vsel %vm63, %v59, 0.0
    %78 = vadd.xlane.f32.xlu0 %v77
    %v79 = vpop.xlane.xlu0 %78
    %v80 = vrot.slane %v79, 4
    %v81 = vadd.f32 %v79, %v80
    %v82 = vrot.slane %v81, 2
    %v83 = vadd.f32 %v81, %v82
    %v84 = vrot.slane %v83, 1
    %v85 = vadd.f32 %v83, %v84
    %s86 = vtos %v85
    %s87 = scalar_lea.smem [#allocation7], 1
    %88 = sst [smem:[%s87]] %s86
    // Predicated region
    $region22: #{tpu_custom_call.1} parent=1 // pred_check
      _
    $region23: #{tpu_custom_call.1} parent=1 // pred_check_branch
      %90 = sbr.rel (0) target = $region25
    $region24: #{tpu_custom_call.1} parent=1 // pred_region
      %s92 = ssub.s32 16, 16
      %93 = vsyncadd [#allocation4], %s92
      %96 = dma.smem_to_hbm [#allocation7], 16, %s3, [#allocation4]
    $region25: #{tpu_custom_call.1} parent=1 // pred_fallthru
      _
    // Predicated region
    $region26: #{tpu_custom_call.1} parent=1 // pred_check
      _
    $region27: #{tpu_custom_call.1} parent=1 // pred_check_branch
      %98 = sbr.rel (0) target = $region29
    $region28: #{tpu_custom_call.1} parent=1 // pred_region
      %99 = dma.done [#allocation4], 16
    $region29: #{tpu_custom_call.1} parent=1 // pred_fallthru
      _
    %100 = sfence
    %101 = vsyncpa [#allocation3], 1
    %102 = vsyncpa [#allocation6], 1
    %103 = vsyncpa [#allocation4], 1

</llo_original>
